<compile_context>
chip_gen: v5e
topology: v5e:2x2
jax: 0.10.0
libtpu: 0.0.40
codegen_flags: <defaults>
</compile_context>

<pallas_src>
import functools
import math

import jax
import jax.numpy as jnp
from jax.experimental import pallas as pl
from jax.experimental.pallas import tpu as pltpu


def _add_pe_kernel(x_ref, pe_ref, o_ref):
    # x_ref / o_ref: (B, TS, D) chunk of batch-first activations.
    # pe_ref:        (TS, D)    matching chunk of the positional table.
    # Broadcast over the leading (untiled) batch axis.
    o_ref[...] = x_ref[...] + pe_ref[...][None, :, :]


def make_positional_encoding(d_model: int, max_len: int = 5000) -> jnp.ndarray:
    """Deterministic pe table, identical to the torch __init__ math.

    Returns a 2-D (max_len, d_model) float32 array (the torch buffer is the
    same data viewed as (max_len, 1, d_model)).
    """
    position = jnp.arange(0, max_len, dtype=jnp.float32)[:, None]            # (max_len, 1)
    div_term = jnp.exp(
        jnp.arange(0, d_model, 2, dtype=jnp.float32) * (-math.log(10000.0) / d_model)
    )                                                                         # (d_model/2,)
    angles = position * div_term                                              # (max_len, d_model/2)
    pe = jnp.zeros((max_len, d_model), dtype=jnp.float32)
    pe = pe.at[:, 0::2].set(jnp.sin(angles))
    pe = pe.at[:, 1::2].set(jnp.cos(angles))
    return pe


def _round_up(a: int, b: int) -> int:
    return ((a + b - 1) // b) * b


def _default_target_block_bytes() -> int:
    """Generation-aware target size for one x block."""
    try:
        kind = jax.devices()[0].device_kind.lower()
    except Exception:  # defensive: fall back to the safest size
        return 2 * 1024 * 1024
    if "v7" in kind:
        # 3.2 TB/s HBM: larger blocks so the ~0.35 us per-step cost stays <5%.
        return 8 * 1024 * 1024
    if "v5 lite" in kind or "v5e" in kind or "v5lite" in kind:
        # Keep the double-buffered footprint small on v5e (16 MiB default
        # scoped VMEM); we also raise vmem_limit_bytes explicitly below.
        return 2 * 1024 * 1024
    return 4 * 1024 * 1024


def positional_encoding_forward(
    x: jnp.ndarray,
    pe: jnp.ndarray,
    *,
    batch_first: bool = False,
    block_rows: int | None = None,
    target_block_bytes: int | None = None,
    in_place: bool = False,
) -> jnp.ndarray:
    """Eval-mode forward: x + pe[:S] (dropout = identity).

    x : (S, B, D) if batch_first=False (PyTorch nn.Transformer convention),
        (B, S, D) if batch_first=True.
    pe: (max_len, D) or the torch buffer shape (max_len, 1, D).
    """
    if pe.ndim == 3:  # torch buffer shape (max_len, 1, D)
        pe = pe[:, 0, :]

    if not batch_first:
        # Layout plumbing only: present (B, S, D) so blocks are (TS, D)-dense.
        x_bsd = jnp.transpose(x, (1, 0, 2))
    else:
        x_bsd = x
    B, S, D = x_bsd.shape
    dtype = x_bsd.dtype
    itemsize = jnp.dtype(dtype).itemsize

    # Sublane multiple for the second-to-last block dim: 8 (f32), 16 (bf16),
    # 32 (int8/fp8).  Keeps DMA rows tile-aligned and stores unmasked.
    min_rows = 8 * max(1, 4 // itemsize)
    s_ceil = _round_up(S, min_rows)

    if block_rows is None:
        if target_block_bytes is None:
            target_block_bytes = _default_target_block_bytes()
        bytes_per_row = max(1, B * D * itemsize)
        block_rows = max(min_rows, int(target_block_bytes) // bytes_per_row)
        # Prefer >= 2 grid steps when S allows it so both v7x TensorCores get
        # chunks (measured-neutral on single-TC v5e/v6e).
        if s_ceil >= 2 * min_rows:
            block_rows = min(block_rows, _round_up(pl.cdiv(s_ceil, 2), min_rows))
    block_rows = max(min_rows, (int(block_rows) // min_rows) * min_rows)
    ts = min(block_rows, s_ceil)
    n_chunks = pl.cdiv(S, ts)
    s_pad = n_chunks * ts

    # Keep the pe chunk for the last (possibly partial) grid step in bounds;
    # padding the tiny 2-D table once is free.  (Overhanging x rows are read
    # as garbage and masked on output writeback by Pallas.)
    pe_slice = pe[:S].astype(dtype)
    if s_pad != S:
        pe_slice = jnp.pad(pe_slice, ((0, s_pad - S), (0, 0)))

    # Double-buffered x + out blocks plus the (small) double-buffered pe chunk.
    x_block_bytes = B * ts * D * itemsize
    pe_block_bytes = ts * D * itemsize
    vmem_needed = 2 * 2 * x_block_bytes + 2 * pe_block_bytes
    vmem_limit = min(64 * 1024 * 1024, max(32 * 1024 * 1024, (vmem_needed * 3) // 2))

    out_bsd = pl.pallas_call(
        _add_pe_kernel,
        out_shape=jax.ShapeDtypeStruct((B, S, D), dtype),
        grid=(n_chunks,),
        in_specs=[
            pl.BlockSpec((B, ts, D), lambda s: (0, s, 0)),
            pl.BlockSpec((ts, D), lambda s: (s, 0)),
        ],
        out_specs=pl.BlockSpec((B, ts, D), lambda s: (0, s, 0)),
        input_output_aliases=({0: 0} if in_place else {}),
        compiler_params=pltpu.CompilerParams(
            dimension_semantics=("parallel",),
            vmem_limit_bytes=int(vmem_limit),
        ),
    )(x_bsd, pe_slice)

    if not batch_first:
        return jnp.transpose(out_bsd, (1, 0, 2))
    return out_bsd


if __name__ == "__main__":
    d_model, max_len = 128, 512
    key = jax.random.PRNGKey(0)
    k0, k1, k2 = jax.random.split(key, 3)
    pe = make_positional_encoding(d_model, max_len=max_len)

    # 1) PyTorch layout (S, B, D), f32, sublane-aligned S.
    S, B = 8, 2
    x = jax.random.normal(k0, (S, B, d_model), dtype=jnp.float32)
    y = jax.block_until_ready(positional_encoding_forward(x, pe))
    y_ref = x + pe[:S][:, None, :]
    assert y.shape == (S, B, d_model)
    assert jnp.allclose(y, y_ref, atol=1e-6, rtol=1e-6)

    # 2) Partial last chunk (S=12 with forced 8-row blocks) + in-place alias
    #    exercised under jit (the transposed x is an intermediate, so the
    #    custom-call aliasing is clean).
    S2 = 12
    x2 = jax.random.normal(k1, (S2, B, d_model), dtype=jnp.float32)
    fwd2 = jax.jit(
        functools.partial(positional_encoding_forward, block_rows=8, in_place=True)
    )
    y2 = jax.block_until_ready(fwd2(x2, pe))
    y2_ref = x2 + pe[:S2][:, None, :]
    assert y2.shape == (S2, B, d_model)
    assert jnp.allclose(y2, y2_ref, atol=1e-6, rtol=1e-6)

    # 3) Batch-first bf16 path (no wrapper transposes), 16-row sublane multiple.
    S3, B3 = 16, 4
    x3 = jax.random.normal(k2, (B3, S3, d_model), dtype=jnp.float32).astype(jnp.bfloat16)
    y3 = jax.block_until_ready(positional_encoding_forward(x3, pe, batch_first=True))
    y3_ref = x3 + pe[:S3].astype(jnp.bfloat16)[None, :, :]
    assert y3.shape == (B3, S3, d_model)
    assert jnp.allclose(
        y3.astype(jnp.float32), y3_ref.astype(jnp.float32), atol=1e-2, rtol=1e-2
    )

    print("KERNEL_OK")
</pallas_src>

<mosaic_0001>
module attributes {stable_mosaic.version = 11 : i64} {
  func.func @_add_pe_kernel(%arg0: i32, %arg1: memref<2x8x128xf32, #tpu.memory_space<vmem>>, %arg2: memref<8x128xf32, #tpu.memory_space<vmem>>, %arg3: memref<2x8x128xf32, #tpu.memory_space<vmem>>) attributes {dimension_semantics = [#tpu.dimension_semantics<parallel>], iteration_bounds = array<i64: 1>, scalar_prefetch = 0 : i64, scratch_operands = 0 : i64, tpu.core_type = #tpu.core_type<tc>, window_params = [{transform_indices = @transform_0, window_bounds = array<i64: 2, 8, 128>}, {transform_indices = @transform_1, window_bounds = array<i64: 8, 128>}, {transform_indices = @transform_2, window_bounds = array<i64: 2, 8, 128>}]} {
    %c0 = arith.constant 0 : index
    %c0_0 = arith.constant 0 : index
    %c0_1 = arith.constant 0 : index
    %0 = vector.load %arg1[%c0, %c0_0, %c0_1] : memref<2x8x128xf32, #tpu.memory_space<vmem>>, vector<2x8x128xf32>
    %c0_2 = arith.constant 0 : index
    %c0_3 = arith.constant 0 : index
    %1 = vector.load %arg2[%c0_2, %c0_3] : memref<8x128xf32, #tpu.memory_space<vmem>>, vector<8x128xf32>
    %2 = vector.shape_cast %1 : vector<8x128xf32> to vector<1x8x128xf32>
    %3 = vector.broadcast %2 : vector<1x8x128xf32> to vector<2x8x128xf32>
    %4 = arith.addf %0, %3 : vector<2x8x128xf32>
    %c0_4 = arith.constant 0 : index
    %c0_5 = arith.constant 0 : index
    %c0_6 = arith.constant 0 : index
    %5 = vector.load %arg3[%c0_4, %c0_5, %c0_6] : memref<2x8x128xf32, #tpu.memory_space<vmem>>, vector<2x8x128xf32>
    tpu.vector_store %arg3[%c0_4, %c0_5, %c0_6], %4 {strides = array<i32>} : memref<2x8x128xf32, #tpu.memory_space<vmem>>, vector<2x8x128xf32>,
    return
  }
  func.func @transform_0(%arg0: i32) -> (i32, i32, i32) {
    %c0_i32 = arith.constant 0 : i32
    %c0_i32_0 = arith.constant 0 : i32
    %c0_i32_1 = arith.constant 0 : i32
    return %c0_i32, %arg0, %c0_i32_0 : i32, i32, i32
  }
  func.func @transform_1(%arg0: i32) -> (i32, i32) {
    %c0_i32 = arith.constant 0 : i32
    %c0_i32_0 = arith.constant 0 : i32
    return %arg0, %c0_i32 : i32, i32
  }
  func.func @transform_2(%arg0: i32) -> (i32, i32, i32) {
    %c0_i32 = arith.constant 0 : i32
    %c0_i32_0 = arith.constant 0 : i32
    %c0_i32_1 = arith.constant 0 : i32
    return %c0_i32, %arg0, %c0_i32_0 : i32, i32, i32
  }
}

</mosaic_0001>

<llo_original>
// kernel: tpu_custom_call.1
$region0: #{tpu_custom_call.1}
  #allocation0 [shape = 'u32[]', space=smem, size = 0x4, offset = 0x4, fixed_abs, tag = 'smem constant byte address 0x4 - core index']
  #allocation1 [shape = 'u32[72,128]{1,0:T(1,128)}', space=vmem, size = 0x9000, scoped, tag = 'internal scratch']
  %s0 = inlined_call_operand.hbm [shape: f32[2,8,128], index: 0, kind: input, shape index: {}]
  %s1 = inlined_call_operand.hbm [shape: f32[8,128], index: 1, kind: input, shape index: {}]
  %s2 = inlined_call_operand.hbm [shape: f32[2,8,128], index: 2, kind: output, shape index: {}]
  %s3 = sld [smem:[#allocation0]]
  $region26: #{tpu_custom_call.1} parent=0
    _
  %s5 = ssub.s32 1, %s3
  %s6 = scalar_select 0, %s5, %s3
  $region1: #{tpu_custom_call.1} parent=0
    #allocation2 [shape = 'u8[8192]{0}', space=vmem, size = 0x2000, scoped, tag = 'input window, operand 0, single buffered']
    #allocation3 [shape = 's32[1]{0}', space=sflag, size = 0x4, scoped, tag = 'scoped memory for tpu_custom_call.1']
    #allocation4 [shape = 's32[1]{0}', space=sflag, size = 0x4, scoped, tag = 'scoped memory for tpu_custom_call.1']
    #allocation5 [shape = 'u8[4096]{0}', space=vmem, size = 0x1000, scoped, tag = 'input window, operand 1, single buffered']
    #allocation6 [shape = 's32[1]{0}', space=sflag, size = 0x4, scoped, tag = 'scoped memory for tpu_custom_call.1']
    #allocation7 [shape = 'u8[8192]{0}', space=vmem, size = 0x2000, scoped, tag = 'output window, operand 0, single buffered']
    %7 = vsyncpa [#allocation3], 0
    %8 = vsyncpa [#allocation6], 0
    %9 = vsyncpa [#allocation4], 0
    // Predicated region
    $region2: #{tpu_custom_call.1} parent=1 // pred_check
      _
    $region3: #{tpu_custom_call.1} parent=1 // pred_check_branch
      %11 = sbr.rel (0) target = $region5
    $region4: #{tpu_custom_call.1} parent=1 // pred_region
      %13 = vsyncadd [#allocation3], 0
      %s14 = sshll.u32 %s0, 4
      %s15 = int_to_ptr.hbm [resolvable:$true] %s14
      %s16 = sshll.u32 [#allocation2], 4
      %s17 = int_to_ptr.vmem [resolvable:$true] %s16
      %22 = dma.hbm_to_vmem [thread:$0]  %s15, 256, %s17, [#allocation3], 128, 128, 8
    $region5: #{tpu_custom_call.1} parent=1 // pred_fallthru
      _
    // Predicated region
    $region6: #{tpu_custom_call.1} parent=1 // pred_check
      _
    $region7: #{tpu_custom_call.1} parent=1 // pred_check_branch
      %24 = sbr.rel (0) target = $region9
    $region8: #{tpu_custom_call.1} parent=1 // pred_region
      %26 = vsyncadd [#allocation6], 0
      %s28 = sshll.u32 %s1, 4
      %s29 = int_to_ptr.hbm [resolvable:$true] %s28
      %s30 = sshll.u32 [#allocation5], 4
      %s31 = int_to_ptr.vmem [resolvable:$true] %s30
      %33 = dma.hbm_to_vmem [thread:$0]  %s29, 128, %s31, [#allocation6]
    $region9: #{tpu_custom_call.1} parent=1 // pred_fallthru
      _
    // Predicated region
    $region10: #{tpu_custom_call.1} parent=1 // pred_check
      _
    $region11: #{tpu_custom_call.1} parent=1 // pred_check_branch
      %35 = sbr.rel (0) target = $region13
    $region12: #{tpu_custom_call.1} parent=1 // pred_region
      %37 = dma.done [#allocation3], 256
    $region13: #{tpu_custom_call.1} parent=1 // pred_fallthru
      _
    // Predicated region
    $region14: #{tpu_custom_call.1} parent=1 // pred_check
      _
    $region15: #{tpu_custom_call.1} parent=1 // pred_check_branch
      %39 = sbr.rel (0) target = $region17
    $region16: #{tpu_custom_call.1} parent=1 // pred_region
      %41 = dma.done [#allocation6], 128
    $region17: #{tpu_custom_call.1} parent=1 // pred_fallthru
      _
    %v42 = vld [vmem:[#allocation2] sm:$0xff]
    %v43 = vld [vmem:[#allocation2 + $0x8] sm:$0xff]
    %v44 = vld [vmem:[#allocation5] sm:$0xff]
    %v45 = vadd.f32 %v42, %v44
    %v46 = vadd.f32 %v43, %v44
    %47 = vst [vmem:[#allocation7] sm:$0xff] %v45
    %48 = vst [vmem:[#allocation7 + $0x8] sm:$0xff] %v46
    // Predicated region
    $region18: #{tpu_custom_call.1} parent=1 // pred_check
      _
    $region19: #{tpu_custom_call.1} parent=1 // pred_check_branch
      %50 = sbr.rel (0) target = $region21
    $region20: #{tpu_custom_call.1} parent=1 // pred_region
      %52 = vsyncadd [#allocation4], 0
      %s53 = sshll.u32 [#allocation7], 4
      %s54 = int_to_ptr.vmem [resolvable:$true] %s53
      %s55 = sshll.u32 %s2, 4
      %s56 = int_to_ptr.hbm [resolvable:$true] %s55
      %61 = dma.vmem_to_hbm [thread:$0]  %s54, 256, %s56, [#allocation4], 128, 128, 8
    $region21: #{tpu_custom_call.1} parent=1 // pred_fallthru
      _
    // Predicated region
    $region22: #{tpu_custom_call.1} parent=1 // pred_check
      _
    $region23: #{tpu_custom_call.1} parent=1 // pred_check_branch
      %63 = sbr.rel (0) target = $region25
    $region24: #{tpu_custom_call.1} parent=1 // pred_region
      %65 = dma.done [#allocation4], 256
    $region25: #{tpu_custom_call.1} parent=1 // pred_fallthru
      _
    %66 = vsyncpa [#allocation3], 1
    %67 = vsyncpa [#allocation6], 1
    %68 = vsyncpa [#allocation4], 1

</llo_original>
